<compile_context>
chip_gen: v7x
topology: tpu7x:2x2x1
jax: 0.10.0
libtpu: 0.0.40
codegen_flags: <defaults>
</compile_context>

<pallas_src>
import functools
import math

import jax
import jax.numpy as jnp
from jax.experimental import pallas as pl
from jax.experimental.pallas import tpu as pltpu

NUM_LAYERS = 12                 # LossFormula default
EPSILON = 1e-6                  # LossFormula default epsilon
CLAMP_MIN, CLAMP_MAX = 1e-5, 1e5
CLAMP_MARGIN = 0.05             # safety margin for static clamp pruning

LANES = 128
SMALL_ROWS = 1024               # <= this many 128-lane rows -> grid-less path
BLOCK_ROWS_TARGET = 2048        # 2048*128*4B = 1 MiB f32 per input block
VMEM_LIMIT_BYTES = 32 * 1024 * 1024

INF = float("inf")
_UNKNOWN = (-INF, INF)

# Static sample_arc: {layer_id: (layer_type, skip_indices)} ; skip != 1 => selected.
SAMPLE_ARC = {
    3:  (0,  (0, 0, 1)),                                  # x + y
    4:  (7,  (1, 1, 1, 0)),                               # (layer3)^2
    5:  (2,  (0, 1, 0, 1, 1)),                            # max(x, 1)
    6:  (9,  (1, 1, 1, 1, 0, 1)),                         # sigmoid(layer4)
    7:  (1,  (1, 1, 1, 0, 1, 0, 1)),                      # layer3 * layer5
    8:  (6,  (1, 1, 1, 1, 1, 1, 1, 0)),                   # sign*log(|layer7|+eps)
    9:  (13, (1, 1, 1, 1, 1, 1, 0, 1, 1)),                # sign*sqrt(|layer6|+eps)
    10: (3,  (1, 1, 1, 1, 1, 1, 1, 1, 0, 0)),             # min(layer8, layer9)
    11: (0,  (1, 1, 1, 1, 1, 1, 1, 0, 1, 1, 0)),          # layer7 + layer10
}


# ----------------------- static interval propagation ------------------------

def _safe_exp(v):
    try:
        return math.exp(v)
    except OverflowError:
        return INF


def _sigmoid_scalar(v):
    if v >= 0.0:
        return 1.0 / (1.0 + _safe_exp(-v))
    e = _safe_exp(v)
    return e / (1.0 + e)


def _interval_of_layer(layer_type, ivs, epsilon):
    """Conservative (sound) output interval of LossLayer BEFORE the clamp."""
    if layer_type == 0:                                   # sum
        return (sum(lo for lo, _ in ivs), sum(hi for _, hi in ivs))
    if layer_type == 1:                                   # product
        lo, hi = ivs[0]
        for lo2, hi2 in ivs[1:]:
            if not all(map(math.isfinite, (lo, hi, lo2, hi2))):
                return _UNKNOWN
            c = (lo * lo2, lo * hi2, hi * lo2, hi * hi2)
            lo, hi = min(c), max(c)
        return (lo, hi)
    if layer_type == 2:                                   # max
        return (max(lo for lo, _ in ivs), max(hi for _, hi in ivs))
    if layer_type == 3:                                   # min
        return (min(lo for lo, _ in ivs), min(hi for _, hi in ivs))

    (lo, hi), = ivs                                       # element-wise: one input
    if layer_type == 4:                                   # negate
        return (-hi, -lo)
    if layer_type == 5:                                   # identity
        return (lo, hi)
    if layer_type == 6:                                   # sign * log(|x| + eps)
        if lo > 0.0:
            return (math.log(lo + epsilon), math.log(hi + epsilon))
        return _UNKNOWN
    if layer_type == 7:                                   # square
        if lo >= 0.0:
            return (lo * lo, hi * hi)
        if hi <= 0.0:
            return (hi * hi, lo * lo)
        return (0.0, max(lo * lo, hi * hi))
    if layer_type == 8:                                   # sign / (|x| + eps)
        if lo > 0.0:
            return (1.0 / (hi + epsilon), 1.0 / (lo + epsilon))
        return (-1.0 / epsilon, 1.0 / epsilon)
    if layer_type == 9:                                   # sigmoid
        return (_sigmoid_scalar(lo), _sigmoid_scalar(hi))
    if layer_type == 10:                                  # tanh
        return (math.tanh(lo), math.tanh(hi))
    if layer_type == 11:                                  # relu
        return (max(lo, 0.0), max(hi, 0.0))
    if layer_type == 12:                                  # abs
        if lo >= 0.0:
            return (lo, hi)
        if hi <= 0.0:
            return (-hi, -lo)
        return (0.0, max(-lo, hi))
    if layer_type == 13:                                  # sign * sqrt(|x| + eps)
        if lo > 0.0:
            return (math.sqrt(lo + epsilon), math.sqrt(hi + epsilon))
        return _UNKNOWN
    if layer_type == 14:                                  # exp
        return (_safe_exp(lo), _safe_exp(hi))
    raise ValueError(f"Unknown layer_type {layer_type}")


# --------------------------- formula evaluation ------------------------------

def _apply_loss_layer(layer_type, vals, ivs, epsilon):
    """LossLayer.forward on already-selected inputs, with trace-time interval
    propagation used to drop dead sign/abs work and dead clamp halves."""
    if layer_type in (0, 1, 2, 3):
        op = {0: lambda a, b: a + b, 1: lambda a, b: a * b,
              2: jnp.maximum, 3: jnp.minimum}[layer_type]
        out = functools.reduce(op, vals)
    else:
        # TODO(synk): multi-input element-wise branches (k > 1) are unsupported;
        # the reference PyTorch code is also only shape-consistent for k == 1.
        assert len(vals) == 1, "element-wise layer_type requires exactly one input"
        out = vals[0]
        lo0, _ = ivs[0]
        pos = lo0 > 0.0          # strictly positive input -> sign()==1, |x|==x
        nonneg = lo0 >= 0.0
        if layer_type == 4:
            out = -out
        elif layer_type == 5:
            out = out
        elif layer_type == 6:
            out = (jnp.log(out + epsilon) if pos
                   else jnp.sign(out) * jnp.log(jnp.abs(out) + epsilon))
        elif layer_type == 7:
            out = out * out
        elif layer_type == 8:
            out = (1.0 / (out + epsilon) if pos
                   else jnp.sign(out) / (jnp.abs(out) + epsilon))
        elif layer_type == 9:
            # Known-nonnegative input: exp(-x) <= 1, direct form is stable and
            # avoids the generic stable-sigmoid selects.
            out = (1.0 / (1.0 + jnp.exp(-out)) if nonneg
                   else jax.nn.sigmoid(out))
        elif layer_type == 10:
            out = jnp.tanh(out)
        elif layer_type == 11:
            out = out if nonneg else jnp.maximum(out, 0.0)
        elif layer_type == 12:
            out = out if nonneg else jnp.abs(out)
        elif layer_type == 13:
            out = (jnp.sqrt(out + epsilon) if pos
                   else jnp.sign(out) * jnp.sqrt(jnp.abs(out) + epsilon))
        elif layer_type == 14:
            out = jnp.exp(out)
        else:
            raise ValueError(f"Unknown layer_type {layer_type}")

    iv = _interval_of_layer(layer_type, ivs, epsilon)
    lo, hi = iv
    # Emit only the live clamp halves (pruned halves are statically no-ops; the
    # margin absorbs f64-interval vs f32-kernel rounding differences).
    if not (lo >= CLAMP_MIN * (1.0 + CLAMP_MARGIN)):
        out = jnp.maximum(out, CLAMP_MIN)
    if not (hi <= CLAMP_MAX * (1.0 - CLAMP_MARGIN)):
        out = jnp.minimum(out, CLAMP_MAX)
    clipped_iv = (min(max(lo, CLAMP_MIN), CLAMP_MAX),
                  min(max(hi, CLAMP_MIN), CLAMP_MAX))
    return out, clipped_iv


def _eval_formula(x, y, sample_arc, num_layers, epsilon):
    """Evaluate the (static) formula DAG element-wise on an f32 slab."""
    prev = {0: x, 1: y, 2: jnp.float32(1.0)}      # constant-1 layer stays scalar
    ivs = {0: _UNKNOWN, 1: _UNKNOWN, 2: (1.0, 1.0)}
    for layer_id in range(3, num_layers):
        layer_type, skips = sample_arc[layer_id]
        sel = [i for i, s in enumerate(skips) if s != 1]
        vals = [prev.get(i, jnp.float32(0.0)) for i in sel]
        sel_ivs = [ivs.get(i, (0.0, 0.0)) for i in sel]
        prev[layer_id], ivs[layer_id] = _apply_loss_layer(
            layer_type, vals, sel_ivs, epsilon)
    last = prev[num_layers - 1]
    if jnp.ndim(last) == 0:      # degenerate arc selecting only constants
        last = jnp.broadcast_to(last, jnp.shape(x))
    return last


# ---------------- small path: grid-less, scalar SMEM output -----------------

def _formula_small_kernel(x_ref, y_ref, out_ref, *, sample_arc, num_layers,
                          epsilon):
    x = x_ref[...].astype(jnp.float32)
    y = y_ref[...].astype(jnp.float32)
    last = _eval_formula(x, y, sample_arc, num_layers, epsilon)
    out_ref[0] = jnp.sum(last)


# -------- tiled path: 1-D parallel grid, per-block (8,128) partial sums -----

def _formula_tiled_kernel(x_ref, y_ref, part_ref, *, sample_arc, num_layers,
                          epsilon, block_rows, num_blocks, valid_rows_last):
    x = x_ref[...].astype(jnp.float32)
    y = y_ref[...].astype(jnp.float32)
    last = _eval_formula(x, y, sample_arc, num_layers, epsilon)
    # (block_rows,128) -> (block_rows/8, 8, 128); leading-axis sum = pure VPU
    # adds.  The single cross-lane reduce happens once, outside the kernel.
    part_ref[0, :, :] = jnp.sum(last.reshape(block_rows // 8, 8, LANES), axis=0)

    if valid_rows_last != block_rows:    # static: the grid is ragged
        @pl.when(pl.program_id(0) == num_blocks - 1)
        def _():
            # Only the last block pays for masking its (garbage) padded rows.
            ridx = jax.lax.broadcasted_iota(jnp.int32, (block_rows, LANES), 0)
            masked = jnp.where(ridx < valid_rows_last, last, 0.0)
            part_ref[0, :, :] = jnp.sum(
                masked.reshape(block_rows // 8, 8, LANES), axis=0)


# ------------------------------- wrapper -------------------------------------

def loss_formula_forward(x, y, sample_arc=SAMPLE_ARC,
                         num_layers=NUM_LAYERS, epsilon=EPSILON):
    xf = x.reshape(-1)                  # keep native dtype; cast in-kernel
    yf = y.reshape(-1)
    assert xf.shape == yf.shape, "x and y must have the same number of elements"
    n = int(xf.shape[0])

    rem = n % LANES
    pad = (LANES - rem) % LANES
    if pad:
        # TODO(synk): a manual-DMA path over the raw 1-D HBM ref would avoid
        # this copy for N % 128 != 0; the zero pad's constant contribution is
        # subtracted from the sum below (no per-element mask in the kernel).
        xf = jnp.pad(xf, (0, pad))
        yf = jnp.pad(yf, (0, pad))
    rows = (n + pad) // LANES
    x2 = xf.reshape(rows, LANES)        # free (bitcast) when pad == 0
    y2 = yf.reshape(rows, LANES)

    if rows <= SMALL_ROWS:
        # Small path: launch/DMA-overhead regime; no grid, no pipelining.
        kernel = functools.partial(_formula_small_kernel, sample_arc=sample_arc,
                                   num_layers=num_layers, epsilon=epsilon)
        total = pl.pallas_call(
            kernel,
            out_shape=jax.ShapeDtypeStruct((1,), jnp.float32),
            in_specs=[pl.BlockSpec((rows, LANES), lambda: (0, 0)),
                      pl.BlockSpec((rows, LANES), lambda: (0, 0))],
            out_specs=pl.BlockSpec(memory_space=pltpu.MemorySpace.SMEM),
        )(x2, y2)[0]
    else:
        # Tiled path: row-block grid, per-block partials, megacore-friendly.
        block_rows = BLOCK_ROWS_TARGET
        if rows < 2 * block_rows:
            # Keep >= 2 blocks so both v7x TensorCores get work.
            block_rows = max(8, ((rows + 1) // 2 + 7) // 8 * 8)
        num_blocks = -(-rows // block_rows)
        valid_rows_last = rows - (num_blocks - 1) * block_rows

        kernel = functools.partial(
            _formula_tiled_kernel, sample_arc=sample_arc, num_layers=num_layers,
            epsilon=epsilon, block_rows=block_rows, num_blocks=num_blocks,
            valid_rows_last=valid_rows_last)
        partials = pl.pallas_call(
            kernel,
            out_shape=jax.ShapeDtypeStruct((num_blocks, 8, LANES), jnp.float32),
            grid=(num_blocks,),
            in_specs=[pl.BlockSpec((block_rows, LANES), lambda i: (i, 0)),
                      pl.BlockSpec((block_rows, LANES), lambda i: (i, 0))],
            out_specs=pl.BlockSpec((1, 8, LANES), lambda i: (i, 0, 0)),
            compiler_params=pltpu.CompilerParams(
                dimension_semantics=("parallel",),
                vmem_limit_bytes=VMEM_LIMIT_BYTES),
        )(x2, y2)
        # Tiny final cross-lane reduce of the (num_blocks, 8, 128) partials.
        total = jnp.sum(partials)

    if pad:
        # Every zero-pad element contributes the trace-time constant
        # formula(0, 0); subtract it instead of masking per element in-kernel.
        z = jnp.zeros((1, 1), jnp.float32)
        c_pad = _eval_formula(z, z, sample_arc, num_layers, epsilon)[0, 0]
        total = total - pad * c_pad
    return total / n


# ------------------------------ reference ------------------------------------

def _reference_loss_layer(layer_type, selected, epsilon):
    """Faithful (un-optimized) LossLayer.forward on selected previous layers."""
    if layer_type == 0:
        out = functools.reduce(lambda a, b: a + b, selected)
    elif layer_type == 1:
        out = functools.reduce(lambda a, b: a * b, selected)
    elif layer_type == 2:
        out = functools.reduce(jnp.maximum, selected)
    elif layer_type == 3:
        out = functools.reduce(jnp.minimum, selected)
    else:
        assert len(selected) == 1
        out = selected[0]
        if layer_type == 4:
            out = -out
        elif layer_type == 5:
            out = out
        elif layer_type == 6:
            out = jnp.sign(out) * jnp.log(jnp.abs(out) + epsilon)
        elif layer_type == 7:
            out = out ** 2
        elif layer_type == 8:
            out = jnp.sign(out) / (jnp.abs(out) + epsilon)
        elif layer_type == 9:
            out = jax.nn.sigmoid(out)
        elif layer_type == 10:
            out = jnp.tanh(out)
        elif layer_type == 11:
            out = jax.nn.relu(out)
        elif layer_type == 12:
            out = jnp.abs(out)
        elif layer_type == 13:
            out = jnp.sign(out) * jnp.sqrt(jnp.abs(out) + epsilon)
        elif layer_type == 14:
            out = jnp.exp(out)
        else:
            raise ValueError(f"Unknown layer_type {layer_type}")
    return jnp.clip(out, CLAMP_MIN, CLAMP_MAX)


def reference_forward(x, y, sample_arc=SAMPLE_ARC,
                      num_layers=NUM_LAYERS, epsilon=EPSILON):
    """Pure-JAX mirror of LossFormula.forward on flattened tensors."""
    xf = x.reshape(-1).astype(jnp.float32)
    yf = y.reshape(-1).astype(jnp.float32)
    prev = [jnp.zeros_like(xf) for _ in range(num_layers)]
    prev[0], prev[1], prev[2] = xf, yf, jnp.ones_like(xf)
    for layer_id in range(3, num_layers):
        layer_type, skips = sample_arc[layer_id]
        selected = [prev[i] for i, s in enumerate(skips) if s != 1]
        prev[layer_id] = _reference_loss_layer(layer_type, selected, epsilon)
    return jnp.mean(prev[-1])


if __name__ == "__main__":
    key = jax.random.PRNGKey(0)
    kx, ky, k2a, k2b, k3a, k3b = jax.random.split(key, 6)

    # 1) Small grid-less path: NCHW [2, 4, 16, 16] f32 (x ~ preds, y ~ labels).
    x = jax.random.uniform(kx, (2, 4, 16, 16), jnp.float32, minval=0.01, maxval=1.0)
    y = jax.random.bernoulli(ky, 0.5, (2, 4, 16, 16)).astype(jnp.float32)
    out = jax.block_until_ready(loss_formula_forward(x, y))
    ref = jax.block_until_ready(reference_forward(x, y))
    assert jnp.allclose(out, ref, rtol=1e-5, atol=1e-5), (out, ref)

    # 2) Tiled copy-free path (N multiple of 128), native bf16 DMA, 2 blocks.
    x2 = jax.random.uniform(k2a, (4, 3, 128, 200), jnp.float32,
                            minval=0.01, maxval=1.0).astype(jnp.bfloat16)
    y2 = jax.random.bernoulli(k2b, 0.5, (4, 3, 128, 200)).astype(jnp.bfloat16)
    out2 = jax.block_until_ready(loss_formula_forward(x2, y2))
    ref2 = jax.block_until_ready(reference_forward(x2, y2))
    assert jnp.allclose(out2, ref2, rtol=1e-4, atol=1e-4), (out2, ref2)

    # 3) Tiled ragged path + sub-128 zero-pad with wrapper-side correction.
    x3 = jax.random.uniform(k3a, (5, 3, 100, 100), jnp.float32,
                            minval=0.01, maxval=1.0)
    y3 = jax.random.bernoulli(k3b, 0.5, (5, 3, 100, 100)).astype(jnp.float32)
    out3 = jax.block_until_ready(loss_formula_forward(x3, y3))
    ref3 = jax.block_until_ready(reference_forward(x3, y3))
    assert jnp.allclose(out3, ref3, rtol=1e-5, atol=1e-5), (out3, ref3)

    print("KERNEL_OK")
</pallas_src>

<mosaic_0001>
module attributes {stable_mosaic.version = 11 : i64} {
  func.func @_formula_small_kernel(%arg0: memref<16x128xf32, #tpu.memory_space<vmem>>, %arg1: memref<16x128xf32, #tpu.memory_space<vmem>>, %arg2: memref<1xf32, #tpu.memory_space<smem>>) attributes {dimension_semantics = [], scalar_prefetch = 0 : i64, scratch_operands = 0 : i64, tpu.core_type = #tpu.core_type<tc>} {
    %c0 = arith.constant 0 : index
    %c0_0 = arith.constant 0 : index
    %0 = vector.load %arg0[%c0, %c0_0] : memref<16x128xf32, #tpu.memory_space<vmem>>, vector<16x128xf32>
    %c0_1 = arith.constant 0 : index
    %c0_2 = arith.constant 0 : index
    %1 = vector.load %arg1[%c0_1, %c0_2] : memref<16x128xf32, #tpu.memory_space<vmem>>, vector<16x128xf32>
    %2 = arith.addf %0, %1 : vector<16x128xf32>
    %cst = arith.constant 9.99999974E-6 : f32
    %3 = vector.broadcast %cst : f32 to vector<16x128xf32>
    %4 = arith.maximumf %2, %3 : vector<16x128xf32>
    %cst_3 = arith.constant 1.000000e+05 : f32
    %5 = vector.broadcast %cst_3 : f32 to vector<16x128xf32>
    %6 = arith.minimumf %4, %5 : vector<16x128xf32>
    %7 = arith.mulf %6, %6 : vector<16x128xf32>
    %cst_4 = arith.constant 9.99999974E-6 : f32
    %8 = vector.broadcast %cst_4 : f32 to vector<16x128xf32>
    %9 = arith.maximumf %7, %8 : vector<16x128xf32>
    %cst_5 = arith.constant 1.000000e+05 : f32
    %10 = vector.broadcast %cst_5 : f32 to vector<16x128xf32>
    %11 = arith.minimumf %9, %10 : vector<16x128xf32>
    %cst_6 = arith.constant 1.000000e+00 : f32
    %12 = vector.broadcast %cst_6 : f32 to vector<16x128xf32>
    %13 = arith.maximumf %0, %12 : vector<16x128xf32>
    %cst_7 = arith.constant 1.000000e+05 : f32
    %14 = vector.broadcast %cst_7 : f32 to vector<16x128xf32>
    %15 = arith.minimumf %13, %14 : vector<16x128xf32>
    %cst_8 = arith.constant 0.000000e+00 : f32
    %16 = vector.broadcast %cst_8 : f32 to vector<16x128xf32>
    %17 = arith.subf %16, %11 : vector<16x128xf32>
    %18 = math.exp %17 : vector<16x128xf32>
    %cst_9 = arith.constant 1.000000e+00 : f32
    %19 = vector.broadcast %cst_9 : f32 to vector<16x128xf32>
    %20 = arith.addf %19, %18 : vector<16x128xf32>
    %cst_10 = arith.constant 1.000000e+00 : f32
    %21 = vector.broadcast %cst_10 : f32 to vector<16x128xf32>
    %22 = arith.divf %21, %20 : vector<16x128xf32>
    %23 = arith.mulf %6, %15 : vector<16x128xf32>
    %cst_11 = arith.constant 9.99999974E-6 : f32
    %24 = vector.broadcast %cst_11 : f32 to vector<16x128xf32>
    %25 = arith.maximumf %23, %24 : vector<16x128xf32>
    %cst_12 = arith.constant 1.000000e+05 : f32
    %26 = vector.broadcast %cst_12 : f32 to vector<16x128xf32>
    %27 = arith.minimumf %25, %26 : vector<16x128xf32>
    %cst_13 = arith.constant 9.99999997E-7 : f32
    %28 = vector.broadcast %cst_13 : f32 to vector<16x128xf32>
    %29 = arith.addf %27, %28 : vector<16x128xf32>
    %30 = math.log %29 : vector<16x128xf32>
    %cst_14 = arith.constant 9.99999974E-6 : f32
    %31 = vector.broadcast %cst_14 : f32 to vector<16x128xf32>
    %32 = arith.maximumf %30, %31 : vector<16x128xf32>
    %cst_15 = arith.constant 9.99999997E-7 : f32
    %33 = vector.broadcast %cst_15 : f32 to vector<16x128xf32>
    %34 = arith.addf %22, %33 : vector<16x128xf32>
    %35 = math.sqrt %34 : vector<16x128xf32>
    %36 = arith.minimumf %32, %35 : vector<16x128xf32>
    %cst_16 = arith.constant 9.99999974E-6 : f32
    %37 = vector.broadcast %cst_16 : f32 to vector<16x128xf32>
    %38 = arith.maximumf %36, %37 : vector<16x128xf32>
    %39 = arith.addf %27, %38 : vector<16x128xf32>
    %cst_17 = arith.constant 1.000000e+05 : f32
    %40 = vector.broadcast %cst_17 : f32 to vector<16x128xf32>
    %41 = arith.minimumf %39, %40 : vector<16x128xf32>
    %42 = vector.shape_cast %41 : vector<16x128xf32> to vector<1x16x128xf32>
    %cst_18 = arith.constant dense<0.000000e+00> : vector<1xf32>
    %43 = vector.multi_reduction <add>, %42, %cst_18 [1, 2] : vector<1x16x128xf32> to vector<1xf32>
    %44 = vector.shape_cast %43 : vector<1xf32> to vector<1x1x1xf32>
    %45 = vector.extract %44[0, 0, 0] : f32 from vector<1x1x1xf32>
    %c0_19 = arith.constant 0 : index
    %46 = memref.load %arg2[%c0_19] : memref<1xf32, #tpu.memory_space<smem>>
    memref.store %45, %arg2[%c0_19] : memref<1xf32, #tpu.memory_space<smem>>
    return
  }
}

</mosaic_0001>

<llo_original>
// kernel: tpu_custom_call.1
$region0: #{tpu_custom_call.1}
  #allocation0 [shape = 'u32[]', space=smem, size = 0x4, offset = 0x4, fixed_abs, tag = 'smem constant byte address 0x4 - core index']
  #allocation1 [shape = 'u32[144,128]{1,0:T(1,128)}', space=vmem, size = 0x12000, scoped, tag = 'internal scratch']
  %s0 = inlined_call_operand.hbm [shape: f32[16,128], index: 0, kind: input, shape index: {}]
  %s1 = inlined_call_operand.hbm [shape: f32[16,128], index: 1, kind: input, shape index: {}]
  %s2 = inlined_call_operand.hbm [shape: f32[1], index: 2, kind: output, shape index: {}]
  %s3 = sld [smem:[#allocation0]]
  $region26: #{tpu_custom_call.1} parent=0
    _
  %s5 = ssub.s32 1, %s3
  %s6 = scalar_select 0, %s5, %s3
  $region1: #{tpu_custom_call.1} parent=0
    #allocation2 [shape = 'u8[8192]{0}', space=vmem, size = 0x2000, scoped, tag = 'input window, operand 0, single buffered']
    #allocation3 [shape = 's32[1]{0}', space=sflag, size = 0x4, scoped, tag = 'scoped memory for tpu_custom_call.1']
    #allocation4 [shape = 's32[1]{0}', space=sflag, size = 0x4, scoped, tag = 'scoped memory for tpu_custom_call.1']
    #allocation5 [shape = 'u8[8192]{0}', space=vmem, size = 0x2000, scoped, tag = 'input window, operand 1, single buffered']
    #allocation6 [shape = 's32[1]{0}', space=sflag, size = 0x4, scoped, tag = 'scoped memory for tpu_custom_call.1']
    #allocation7 [shape = 'u8[512]{0}', space=smem, size = 0x200, scoped, tag = 'output window, operand 0, single buffered']
    %7 = vsyncpa [#allocation3], 0
    %8 = vsyncpa [#allocation6], 0
    %9 = vsyncpa [#allocation4], 0
    // Predicated region
    $region2: #{tpu_custom_call.1} parent=1 // pred_check
      _
    $region3: #{tpu_custom_call.1} parent=1 // pred_check_branch
      %11 = sbr.rel (0) target = $region5
    $region4: #{tpu_custom_call.1} parent=1 // pred_region
      %s13 = ssub.s32 256, 256
      %14 = vsyncadd [#allocation3], %s13
      %s15 = sshll.u32 [#allocation2], 4
      %s16 = int_to_ptr.vmem [resolvable:$true] %s15
      %21 = dma.hbm_to_vmem [thread:$0]  %s0, 256, %s16, [#allocation3], 128, 128, 8
    $region5: #{tpu_custom_call.1} parent=1 // pred_fallthru
      _
    // Predicated region
    $region6: #{tpu_custom_call.1} parent=1 // pred_check
      _
    $region7: #{tpu_custom_call.1} parent=1 // pred_check_branch
      %23 = sbr.rel (0) target = $region9
    $region8: #{tpu_custom_call.1} parent=1 // pred_region
      %s25 = ssub.s32 256, 256
      %26 = vsyncadd [#allocation6], %s25
      %s27 = sshll.u32 [#allocation5], 4
      %s28 = int_to_ptr.vmem [resolvable:$true] %s27
      %33 = dma.hbm_to_vmem [thread:$0]  %s1, 256, %s28, [#allocation6], 128, 128, 8
    $region9: #{tpu_custom_call.1} parent=1 // pred_fallthru
      _
    // Predicated region
    $region10: #{tpu_custom_call.1} parent=1 // pred_check
      _
    $region11: #{tpu_custom_call.1} parent=1 // pred_check_branch
      %35 = sbr.rel (0) target = $region13
    $region12: #{tpu_custom_call.1} parent=1 // pred_region
      %36 = dma.done [#allocation3], 256
    $region13: #{tpu_custom_call.1} parent=1 // pred_fallthru
      _
    // Predicated region
    $region14: #{tpu_custom_call.1} parent=1 // pred_check
      _
    $region15: #{tpu_custom_call.1} parent=1 // pred_check_branch
      %38 = sbr.rel (0) target = $region17
    $region16: #{tpu_custom_call.1} parent=1 // pred_region
      %39 = dma.done [#allocation6], 256
    $region17: #{tpu_custom_call.1} parent=1 // pred_fallthru
      _
    %v40 = vld [vmem:[#allocation2] sm:$0xff]
    %v41 = vld [vmem:[#allocation2 + $0x8] sm:$0xff]
    %v42 = vld [vmem:[#allocation5] sm:$0xff]
    %v43 = vld [vmem:[#allocation5 + $0x8] sm:$0xff]
    %v44 = vadd.f32 %v40, %v42
    %v45 = vadd.f32 %v41, %v43
    %v46 = vmax.f32 %v44, 1e-05
    %v47 = vmax.f32 %v45, 1e-05
    %v48 = vmin.f32 %v46, 100000.0
    %v49 = vmin.f32 %v47, 100000.0
    %v50 = vmul.f32 %v48, %v48
    %v51 = vmul.f32 %v49, %v49
    %v52 = vmax.f32 %v50, 1e-05
    %v53 = vmax.f32 %v51, 1e-05
    %v54 = vmin.f32 %v52, 100000.0
    %v55 = vmin.f32 %v53, 100000.0
    %v56 = vmax.f32 %v40, 1.0
    %v57 = vmax.f32 %v41, 1.0
    %v58 = vmin.f32 %v56, 100000.0
    %v59 = vmin.f32 %v57, 100000.0
    %v60 = vsub.f32 0.0, %v54
    %v61 = vsub.f32 0.0, %v55
    %v62 = vmul.f32 %v60, 1.442695
    %v63 = vpow.pop %v62
    %v64 = vmul.f32 %v61, 1.442695
    %v65 = vpow.pop %v64
    %v66 = vadd.f32 %v63, 1.0
    %v67 = vadd.f32 %v65, 1.0
    %v68 = vrcp.pop %v66
    %v69 = vmul.f32 1.0, %v68
    %v70 = vrcp.pop %v67
    %v71 = vmul.f32 1.0, %v70
    %v72 = vmul.f32 %v48, %v58
    %v73 = vmul.f32 %v49, %v59
    %v74 = vmax.f32 %v72, 1e-05
    %v75 = vmax.f32 %v73, 1e-05
    %v76 = vmin.f32 %v74, 100000.0
    %v77 = vmin.f32 %v75, 100000.0
    %v78 = vadd.f32 %v76, 1e-06
    %v79 = vadd.f32 %v77, 1e-06
    %v80 = vlog2.pop %v78
    %v81 = vmul.f32 %v80, 0.6931472
    %v82 = vlog2.pop %v79
    %v83 = vmul.f32 %v82, 0.6931472
    %v84 = vmax.f32 %v81, 1e-05
    %v85 = vmax.f32 %v83, 1e-05
    %v86 = vadd.f32 %v69, 1e-06
    %v87 = vadd.f32 %v71, 1e-06
    %v88 = vrsqrt.pop %v86
    %v89 = vmul.f32 %v86, %v88
    %vm90 = vcmp.eq.f32.partialorder %v86, inf
    %v91 = vsel %vm90, %v86, %v89
    %vm92 = vcmp.eq.f32.partialorder %v86, 0.0
    %v93 = vand.u32 %v86, 2147483648
    %v94 = vsel %vm92, %v93, %v91
    %v95 = vrsqrt.pop %v87
    %v96 = vmul.f32 %v87, %v95
    %vm97 = vcmp.eq.f32.partialorder %v87, inf
    %v98 = vsel %vm97, %v87, %v96
    %vm99 = vcmp.eq.f32.partialorder %v87, 0.0
    %v100 = vand.u32 %v87, 2147483648
    %v101 = vsel %vm99, %v100, %v98
    %v102 = vmin.f32 %v84, %v94
    %v103 = vmin.f32 %v85, %v101
    %v104 = vmax.f32 %v102, 1e-05
    %v105 = vmax.f32 %v103, 1e-05
    %v106 = vadd.f32 %v76, %v104
    %v107 = vadd.f32 %v77, %v105
    %v108 = vmin.f32 %v106, 100000.0
    %v109 = vmin.f32 %v107, 100000.0
    %v110 = vadd.f32 %v108, %v109
    %111 = vadd.xlane.f32.xlu0 %v110
    %v112 = vpop.xlane.xlu0 %111
    %v113 = vrot.slane %v112, 4
    %v114 = vadd.f32 %v112, %v113
    %v115 = vrot.slane %v114, 2
    %v116 = vadd.f32 %v114, %v115
    %v117 = vrot.slane %v116, 1
    %v118 = vadd.f32 %v116, %v117
    %s119 = vtos %v118
    %s120 = scalar_lea.smem [#allocation7], 0
    %121 = sst [smem:[%s120]] %s119
    // Predicated region
    $region18: #{tpu_custom_call.1} parent=1 // pred_check
      _
    $region19: #{tpu_custom_call.1} parent=1 // pred_check_branch
      %123 = sbr.rel (0) target = $region21
    $region20: #{tpu_custom_call.1} parent=1 // pred_region
      %s125 = ssub.s32 16, 16
      %126 = vsyncadd [#allocation4], %s125
      %129 = dma.smem_to_hbm [#allocation7], 16, %s2, [#allocation4]
    $region21: #{tpu_custom_call.1} parent=1 // pred_fallthru
      _
    // Predicated region
    $region22: #{tpu_custom_call.1} parent=1 // pred_check
      _
    $region23: #{tpu_custom_call.1} parent=1 // pred_check_branch
      %131 = sbr.rel (0) target = $region25
    $region24: #{tpu_custom_call.1} parent=1 // pred_region
      %132 = dma.done [#allocation4], 16
    $region25: #{tpu_custom_call.1} parent=1 // pred_fallthru
      _
    %133 = sfence
    %134 = vsyncpa [#allocation3], 1
    %135 = vsyncpa [#allocation6], 1
    %136 = vsyncpa [#allocation4], 1

</llo_original>
